<compile_context>
chip_gen: v5e
topology: v5e:2x2
jax: 0.10.0
libtpu: 0.0.40
codegen_flags: <defaults>
</compile_context>

<pallas_src>
import functools

import numpy as np
import jax
import jax.numpy as jnp
from jax import lax
from jax.experimental import pallas as pl
from jax.experimental.pallas import tpu as pltpu


# ----------------------------- math helpers ----------------------------------

def _erf_poly(x):
    # Abramowitz & Stegun 7.1.26 rational approximation (|err| < 1.5e-7), built
    # only from ops that lower cleanly in Mosaic (mul/add/exp/select).
    a1, a2, a3, a4, a5 = 0.254829592, -0.284496736, 1.421413741, -1.453152027, 1.061405429
    p = 0.3275911
    sgn = jnp.where(x >= 0.0, 1.0, -1.0)
    ax = jnp.abs(x)
    t = 1.0 / (1.0 + p * ax)
    poly = ((((a5 * t + a4) * t + a3) * t + a2) * t + a1) * t
    return sgn * (1.0 - poly * jnp.exp(-ax * ax))


def _gelu_exact(x):
    # Matches torch.nn.functional.gelu (erf variant) up to ~1e-7.  Left simple:
    # kernel B is memory bound, this is VPU/EUP filler under the gather DMAs.
    return 0.5 * x * (1.0 + _erf_poly(x * (1.0 / np.sqrt(2.0))))


# --------------------------- tiling / packing helpers -------------------------

def _pick_dim_tile(total, cap, mult):
    """Largest divisor of `total` that is <= cap and a multiple of `mult`."""
    best = None
    d = mult
    while d <= min(total, cap):
        if total % d == 0:
            best = d
        d += mult
    return best if best is not None else total


def _pick_token_tile(T, hk, row_words, budget_bytes=16 << 20, cap=256):
    """Token tile for kernel B from a VMEM budget (conservative enough for the
    16 MiB default scoped VMEM on v5e and the 64 MiB physical VMEM on v7x)."""
    row_pad = ((row_words + 127) // 128) * 128           # lane padding of scratch
    def bytes_for(tt):
        scratch = hk * tt * row_pad * 4                   # gather buffer (single)
        io = 2 * 2 * tt * 3 * 128 * 4                     # x/s/out blocks, dbl-buffered
        return scratch + io
    cands = [d for d in range(8, min(T, cap) + 1, 8) if T % d == 0]
    if not cands:
        cands = [T]
    fit = [c for c in cands if bytes_for(c) <= budget_bytes] or [cands[0]]
    # Keep >= 2 grid steps where possible so v7x's 2 TensorCores both get work.
    two = [c for c in fit if T // c >= 2]
    return max(two) if two else max(fit)


def _pack_bf16_pairs(lo, hi):
    """uint32 word: bf16(lo) in bits [0,16), bf16(hi) in bits [16,32)."""
    lo_b = lax.bitcast_convert_type(lo.astype(jnp.bfloat16), jnp.uint16).astype(jnp.uint32)
    hi_b = lax.bitcast_convert_type(hi.astype(jnp.bfloat16), jnp.uint16).astype(jnp.uint32)
    return lo_b | (hi_b << 16)


def pack_expert_tables(expert_down, expert_up, *, input_dim, output_dim, expert_hidden_size):
    """Build the per-expert packed row [down | up] used by the in-kernel gather.

    Down row (layout [eh, Din]):  word (ee, i) packs cols (i, i + Din/2)   -> eh*Din/2 words
    Up   row (stored [eh, Dout]): word (ee, o) packs cols (o, o + Dout/2)  -> eh*Dout/2 words
    bf16 values packed pairwise into u32 so every gathered row is a whole-word DMA.
    """
    assert input_dim % 2 == 0 and output_dim % 2 == 0
    n = expert_down.shape[0]
    eh = expert_hidden_size
    dhalf, ohalf = input_dim // 2, output_dim // 2
    dw = expert_down.astype(jnp.float32).reshape(n, eh, input_dim)
    up = expert_up.astype(jnp.float32).reshape(n, output_dim, eh).transpose(0, 2, 1)  # [n, eh, Dout]
    dw_words = _pack_bf16_pairs(dw[..., :dhalf], dw[..., dhalf:]).reshape(n, eh * dhalf)
    up_words = _pack_bf16_pairs(up[..., :ohalf], up[..., ohalf:]).reshape(n, eh * ohalf)
    return jnp.concatenate([dw_words, up_words], axis=-1)  # [n, eh*(Din+Dout)//2] u32


# ----------------------------- Pallas kernels --------------------------------

def qproj_kernel(x_ref, w_ref, b_ref, o_ref):
    # x: [tm, Din], w: [Din, tn], b: [1, tn] -> o: [tm, tn]
    o_ref[...] = (
        jnp.dot(x_ref[...], w_ref[...], preferred_element_type=jnp.float32)
        + b_ref[...]
    )


def peer_expert_kernel(idx_ref, x_ref, s_ref, cat_hbm, o_ref, cat_buf, sem,
                       *, hk, eh, din, dout, tt):
    """Per token block: DMA-gather expert rows from HBM, then down-proj -> GELU
    -> routing weight -> up-proj -> sum over all (head, expert) slots.

    idx_ref : SMEM [T*hk] int32       expert id per (token, head*k slot) (scalar prefetch)
    x_ref   : VMEM [tt, din]  f32     token activations
    s_ref   : VMEM [tt, hk]   f32     softmax routing weights
    cat_hbm : HBM  [N, eh*(din+dout)/2] uint32   packed bf16 expert rows [down | up]
    o_ref   : VMEM [tt, dout] f32
    cat_buf : VMEM [hk, tt, row_words] uint32    gather landing buffer
    sem     : DMA semaphores, one per expert slot

    Each grid step is self-contained (gather -> wait -> compute), so the token
    axis can be marked "parallel" and split across v7x's two TensorCores without
    any cross-step prologue hazard.  Overlap comes from issuing the whole gather
    up front and waiting per slot, so slot 0's compute runs while later slots'
    DMAs are still in flight.
    """
    base_tok = pl.program_id(0) * tt
    dhalf = din // 2
    ohalf = dout // 2
    down_words = eh * dhalf
    mask_hi = jnp.uint32(0xFFFF0000)

    # 1) Kick off the full gather for this token block: one small row DMA per
    #    (token, slot).  All descriptors are issued up front; slot j signals sem[j].
    #    (Production note: batching waits / larger row groups would cut the
    #    per-descriptor overhead further, but per-copy start/wait is the
    #    battle-tested, always-correct form.)
    @pl.loop(0, hk)
    def _(j):
        @pl.loop(0, tt)
        def _(t):
            e = idx_ref[(base_tok + t) * hk + j]
            pltpu.make_async_copy(cat_hbm.at[e], cat_buf.at[j, t], sem.at[j]).start()

    x = x_ref[...]                  # [tt, din] f32
    s = s_ref[...]                  # [tt, hk]  f32
    x_lo = x[:, :dhalf]
    x_hi = x[:, dhalf:]

    acc_lo = jnp.zeros((tt, ohalf), jnp.float32)
    acc_hi = jnp.zeros((tt, ohalf), jnp.float32)

    for j in range(hk):             # static unroll over expert slots (hk is small)
        # Wait for slot j's tt row copies (per-copy waits drain sem[j]).
        @pl.loop(0, tt)
        def _(t):
            pltpu.make_async_copy(cat_hbm.at[0], cat_buf.at[j, 0], sem.at[j]).wait()

        row = cat_buf[j]            # [tt, row_words] uint32 (packed bf16 pairs)
        sj = s[:, j:j + 1]          # [tt, 1] routing weight, broadcast over eh & dout
        for ee in range(eh):
            # --- down projection: h = <dw_row, x> (bf16 weights, f32 accumulate) ---
            dwj = row[:, ee * dhalf:(ee + 1) * dhalf]
            d_lo = pltpu.bitcast(dwj << 16, jnp.float32)      # input cols [0, din/2)
            d_hi = pltpu.bitcast(dwj & mask_hi, jnp.float32)  # input cols [din/2, din)
            h = (jnp.sum(d_lo * x_lo, axis=-1, keepdims=True)
                 + jnp.sum(d_hi * x_hi, axis=-1, keepdims=True))        # [tt, 1]
            # activation (dropout p=0.0 -> identity) + routing score fold
            h = _gelu_exact(h) * sj
            # --- up projection: accumulate uw_row * h into the output halves ---
            uo = down_words + ee * ohalf
            uwj = row[:, uo:uo + ohalf]
            u_lo = pltpu.bitcast(uwj << 16, jnp.float32)      # out cols [0, dout/2)
            u_hi = pltpu.bitcast(uwj & mask_hi, jnp.float32)  # out cols [dout/2, dout)
            acc_lo = acc_lo + u_lo * h
            acc_hi = acc_hi + u_hi * h

    o_ref[:, :ohalf] = acc_lo
    o_ref[:, ohalf:] = acc_hi


# ------------------------------ parameter init --------------------------------

def init_peer_params(key, *, input_dim, output_dim, num_experts, num_heads,
                     query_dim, product_key_dim, expert_hidden_size):
    n_dims = len(product_key_dim)
    ks = jax.random.split(key, 4 + n_dims)
    sub_key_dim = query_dim // n_dims
    # Expert tables are stored in bf16 (halves the dominant gather stream);
    # the reference path upcasts the same bf16 values so both paths agree.
    expert_down = jax.random.normal(
        ks[1 + n_dims], (num_experts, input_dim * expert_hidden_size), jnp.float32
    ).astype(jnp.bfloat16)
    expert_up = jax.random.normal(
        ks[2 + n_dims], (num_experts, output_dim * expert_hidden_size), jnp.float32
    ).astype(jnp.bfloat16)
    params = {
        "w_q": jax.random.normal(ks[0], (input_dim, num_heads * query_dim), jnp.float32) * 0.02,
        "b_q": jnp.zeros((num_heads * query_dim,), jnp.float32),
        "bn_gamma": jnp.ones((query_dim,), jnp.float32),
        "bn_beta": jnp.zeros((query_dim,), jnp.float32),
        "sub_keys": [
            jax.random.normal(ks[1 + i], (d, sub_key_dim), jnp.float32) * 0.02
            for i, d in enumerate(product_key_dim)
        ],
        "expert_down": expert_down,
        "expert_up": expert_up,
        # Packed once at init: per-expert u32 row [down | up] consumed by kernel B.
        "expert_cat_packed": pack_expert_tables(
            expert_down, expert_up, input_dim=input_dim, output_dim=output_dim,
            expert_hidden_size=expert_hidden_size),
    }
    return params


# ------------------------------- forward pass ---------------------------------

def peer_forward(params, hidden_states, *, num_heads, query_dim, product_key_dim,
                 num_experts_per_tok, expert_hidden_size, output_dim,
                 norm_keys=True, norm_query=True, batch_norm_query=True,
                 token_tile=None, use_pallas=True):
    B, S, Din = hidden_states.shape
    T = B * S
    x_flat = hidden_states.reshape(T, Din).astype(jnp.float32)
    HQ = num_heads * query_dim

    # --- query projection (Pallas kernel A, tiled; both grid axes parallel) ---
    if use_pallas:
        tm = _pick_dim_tile(T, 512, 8)
        tn = _pick_dim_tile(HQ, 512, 128)
        q = pl.pallas_call(
            qproj_kernel,
            out_shape=jax.ShapeDtypeStruct((T, HQ), jnp.float32),
            grid=(T // tm, HQ // tn),
            in_specs=[
                pl.BlockSpec((tm, Din), lambda i, j: (i, 0)),
                pl.BlockSpec((Din, tn), lambda i, j: (0, j)),
                pl.BlockSpec((1, tn), lambda i, j: (0, j)),
            ],
            out_specs=pl.BlockSpec((tm, tn), lambda i, j: (i, j)),
            compiler_params=pltpu.CompilerParams(
                dimension_semantics=("parallel", "parallel")),
        )(x_flat, params["w_q"], params["b_q"].reshape(1, HQ))
    else:
        q = x_flat @ params["w_q"] + params["b_q"][None, :]
    queries = q.reshape(B, S, num_heads, query_dim)

    # --- BatchNorm1d over query_dim (training-mode batch stats, eps=1e-5) ---
    if batch_norm_query:
        q2 = queries.reshape(-1, query_dim)
        mean = jnp.mean(q2, axis=0)
        var = jnp.mean((q2 - mean) ** 2, axis=0)  # biased variance, torch BN training
        q2 = (q2 - mean) / jnp.sqrt(var + 1e-5) * params["bn_gamma"] + params["bn_beta"]
        queries = q2.reshape(B, S, num_heads, query_dim)

    # --- product-key routing (plain-JAX glue) ---
    # TODO(synk): lax.top_k / candidate cartesian combine have no clean Mosaic
    # lowering at this granularity; they stay in XLA.
    n_dims = len(product_key_dim)
    chunk = query_dim // n_dims
    per_dim_k = int(np.ceil(num_experts_per_tok ** (1.0 / n_dims)))
    comb_scores = jnp.zeros((B, S, num_heads, 1), jnp.float32)
    comb_idx = jnp.zeros((B, S, num_heads, 1), jnp.int32)
    for i, dim_size in enumerate(product_key_dim):
        qc = queries[..., i * chunk:(i + 1) * chunk]
        sk = params["sub_keys"][i]
        if norm_keys:
            sk = sk / jnp.maximum(jnp.linalg.norm(sk, axis=-1, keepdims=True), 1e-12)
        if norm_query:
            qc = qc / jnp.maximum(jnp.linalg.norm(qc, axis=-1, keepdims=True), 1e-12)
        scores_i = jnp.einsum("bshd,nd->bshn", qc, sk)
        k_i = min(dim_size, per_dim_k)
        ts, ti = jax.lax.top_k(scores_i, k_i)
        # cartesian combine (row-major flat index, summed scores), same order as
        # itertools.product in the reference implementation.
        comb_scores = (comb_scores[..., :, None] + ts[..., None, :]).reshape(B, S, num_heads, -1)
        comb_idx = (comb_idx[..., :, None] * dim_size + ti[..., None, :]).reshape(B, S, num_heads, -1)

    assert comb_scores.shape[-1] >= num_experts_per_tok
    top_scores, pos = jax.lax.top_k(comb_scores, num_experts_per_tok)
    indices = jnp.take_along_axis(comb_idx, pos, axis=-1)      # [B,S,H,K]
    router_w = jax.nn.softmax(top_scores, axis=-1)             # [B,S,H,K]

    eh = expert_hidden_size
    K = num_experts_per_tok
    HK = num_heads * K
    idx_flat = indices.reshape(T * HK).astype(jnp.int32)       # SMEM scalar-prefetch indices
    s_flat = router_w.reshape(T, HK).astype(jnp.float32)       # no eh-repeat in HBM

    if use_pallas:
        assert Din % 2 == 0 and output_dim % 2 == 0
        row_words = eh * (Din + output_dim) // 2
        TT = token_tile if token_tile is not None else _pick_token_tile(T, HK, row_words)
        assert T % TT == 0

        # Explicit VMEM limit (v5e default scoped VMEM is only 16 MiB; keep the
        # cap well under v7x's 64 MiB physical VMEM).
        row_pad = ((row_words + 127) // 128) * 128
        est = HK * TT * row_pad * 4 + 2 * 2 * TT * 3 * 128 * 4 + (1 << 20)
        vmem_limit = int(min(max(2 * est, 8 << 20), 40 << 20))

        kernel = functools.partial(
            peer_expert_kernel, hk=HK, eh=eh, din=Din, dout=output_dim, tt=TT)
        out = pl.pallas_call(
            kernel,
            out_shape=jax.ShapeDtypeStruct((T, output_dim), jnp.float32),
            grid_spec=pltpu.PrefetchScalarGridSpec(
                num_scalar_prefetch=1,                       # expert indices -> SMEM
                grid=(T // TT,),
                in_specs=[
                    pl.BlockSpec((TT, Din), lambda i, idx: (i, 0)),
                    pl.BlockSpec((TT, HK), lambda i, idx: (i, 0)),
                    pl.BlockSpec(memory_space=pl.ANY),       # packed expert table stays in HBM
                ],
                out_specs=pl.BlockSpec((TT, output_dim), lambda i, idx: (i, 0)),
                scratch_shapes=[
                    pltpu.VMEM((HK, TT, row_words), jnp.uint32),   # gather landing buffer
                    pltpu.SemaphoreType.DMA((HK,)),                # one sem per expert slot
                ],
            ),
            compiler_params=pltpu.CompilerParams(
                dimension_semantics=("parallel",),           # lets v7x split tokens over 2 TCs
                vmem_limit_bytes=vmem_limit,
            ),
        )(idx_flat, x_flat, s_flat, params["expert_cat_packed"])
    else:
        # Pure-JAX reference path (same bf16-rounded expert weights).
        dw = params["expert_down"].astype(jnp.float32)[indices]
        uw = params["expert_up"].astype(jnp.float32)[indices]
        dw = dw.reshape(B, S, num_heads, K, eh, Din)
        uw = uw.reshape(B, S, num_heads, K, output_dim, eh)
        x3 = hidden_states.astype(jnp.float32)
        expert_in = jnp.einsum("bshked,bsd->bshke", dw, x3)
        act = jax.nn.gelu(expert_in, approximate=False)
        expert_out = jnp.einsum("bshkoe,bshke->bshko", uw, act)
        out = jnp.sum(expert_out * router_w[..., None], axis=(2, 3)).reshape(T, output_dim)

    return out.reshape(B, S, output_dim)


# ----------------------------------- main --------------------------------------

if __name__ == "__main__":
    # Small, module-consistent configuration.
    B, S = 2, 8
    input_dim, output_dim = 32, 32
    num_heads, query_dim = 4, 64
    product_key_dim = [16, 16]
    num_experts = 16 * 16
    num_experts_per_tok = 8
    expert_hidden_size = 1

    key = jax.random.PRNGKey(0)
    kp, kx = jax.random.split(key)
    params = init_peer_params(
        kp,
        input_dim=input_dim, output_dim=output_dim, num_experts=num_experts,
        num_heads=num_heads, query_dim=query_dim,
        product_key_dim=product_key_dim, expert_hidden_size=expert_hidden_size,
    )
    x = jax.random.normal(kx, (B, S, input_dim), jnp.float32)

    cfg = dict(
        num_heads=num_heads, query_dim=query_dim, product_key_dim=product_key_dim,
        num_experts_per_tok=num_experts_per_tok, expert_hidden_size=expert_hidden_size,
        output_dim=output_dim,
    )

    out = peer_forward(params, x, use_pallas=True, **cfg)
    out = jax.block_until_ready(out)
    assert out.shape == (B, S, output_dim)

    # Cross-check kernels against a pure-JAX reference of the same forward.
    ref = jax.block_until_ready(peer_forward(params, x, use_pallas=False, **cfg))
    np.testing.assert_allclose(np.asarray(out), np.asarray(ref), rtol=1e-4, atol=1e-4)

    print("KERNEL_OK")
</pallas_src>

<mosaic_0001>
module attributes {stable_mosaic.version = 11 : i64} {
  func.func @qproj_kernel(%arg0: i32, %arg1: i32, %arg2: memref<16x32xf32, #tpu.memory_space<vmem>>, %arg3: memref<32x256xf32, #tpu.memory_space<vmem>>, %arg4: memref<1x256xf32, #tpu.memory_space<vmem>>, %arg5: memref<16x256xf32, #tpu.memory_space<vmem>>) attributes {dimension_semantics = [#tpu.dimension_semantics<parallel>, #tpu.dimension_semantics<parallel>], iteration_bounds = array<i64: 1, 1>, scalar_prefetch = 0 : i64, scratch_operands = 0 : i64, tpu.core_type = #tpu.core_type<tc>, window_params = [{transform_indices = @transform_0, window_bounds = array<i64: 16, 32>}, {transform_indices = @transform_1, window_bounds = array<i64: 32, 256>}, {transform_indices = @transform_2, window_bounds = array<i64: 1, 256>}, {transform_indices = @transform_3, window_bounds = array<i64: 16, 256>}]} {
    %c0 = arith.constant 0 : index
    %c0_0 = arith.constant 0 : index
    %0 = vector.load %arg2[%c0, %c0_0] : memref<16x32xf32, #tpu.memory_space<vmem>>, vector<16x32xf32>
    %c0_1 = arith.constant 0 : index
    %c0_2 = arith.constant 0 : index
    %1 = vector.load %arg3[%c0_1, %c0_2] : memref<32x256xf32, #tpu.memory_space<vmem>>, vector<32x256xf32>
    %cst = arith.constant dense<0.000000e+00> : vector<16x256xf32>
    %2 = tpu.matmul %0, %1, %cst {dimension_numbers = #tpu.dot_dimension_numbers<[1], [0], [0], [1], [0, 0, 1, 1], [], []>} : vector<16x32xf32>, vector<32x256xf32>, vector<16x256xf32> -> vector<16x256xf32>
    %c0_3 = arith.constant 0 : index
    %c0_4 = arith.constant 0 : index
    %3 = vector.load %arg4[%c0_3, %c0_4] : memref<1x256xf32, #tpu.memory_space<vmem>>, vector<1x256xf32>
    %4 = vector.broadcast %3 : vector<1x256xf32> to vector<16x256xf32>
    %5 = arith.addf %2, %4 : vector<16x256xf32>
    %c0_5 = arith.constant 0 : index
    %c0_6 = arith.constant 0 : index
    %6 = vector.load %arg5[%c0_5, %c0_6] : memref<16x256xf32, #tpu.memory_space<vmem>>, vector<16x256xf32>
    tpu.vector_store %arg5[%c0_5, %c0_6], %5 {strides = array<i32>} : memref<16x256xf32, #tpu.memory_space<vmem>>, vector<16x256xf32>,
    return
  }
  func.func @transform_0(%arg0: i32, %arg1: i32) -> (i32, i32) {
    %c0_i32 = arith.constant 0 : i32
    %c0_i32_0 = arith.constant 0 : i32
    return %arg0, %c0_i32 : i32, i32
  }
  func.func @transform_1(%arg0: i32, %arg1: i32) -> (i32, i32) {
    %c0_i32 = arith.constant 0 : i32
    %c0_i32_0 = arith.constant 0 : i32
    return %c0_i32, %arg1 : i32, i32
  }
  func.func @transform_2(%arg0: i32, %arg1: i32) -> (i32, i32) {
    %c0_i32 = arith.constant 0 : i32
    %c0_i32_0 = arith.constant 0 : i32
    return %c0_i32, %arg1 : i32, i32
  }
  func.func @transform_3(%arg0: i32, %arg1: i32) -> (i32, i32) {
    %c0_i32 = arith.constant 0 : i32
    return %arg0, %arg1 : i32, i32
  }
}

</mosaic_0001>

<llo_original>
// kernel: tpu_custom_call.1
$region0: #{tpu_custom_call.1}
  #allocation0 [shape = 'u32[]', space=smem, size = 0x4, offset = 0x4, fixed_abs, tag = 'smem constant byte address 0x4 - core index']
  #allocation1 [shape = 'u32[72,128]{1,0:T(1,128)}', space=vmem, size = 0x9000, scoped, tag = 'internal scratch']
  %s0 = inlined_call_operand.hbm [shape: f32[16,32], index: 0, kind: input, shape index: {}]
  %s1 = inlined_call_operand.hbm [shape: f32[32,256], index: 1, kind: input, shape index: {}]
  %s2 = inlined_call_operand.hbm [shape: f32[1,256], index: 2, kind: input, shape index: {}]
  %s3 = inlined_call_operand.hbm [shape: f32[16,256], index: 3, kind: output, shape index: {}]
  %s4 = sld [smem:[#allocation0]]
  $region34: #{tpu_custom_call.1} parent=0
    _
  %s6 = ssub.s32 1, %s4
  %s7 = scalar_select 0, %s6, %s4
  $region1: #{tpu_custom_call.1} parent=0
    #allocation2 [shape = 'u8[8192]{0}', space=vmem, size = 0x2000, scoped, tag = 'input window, operand 0, single buffered']
    #allocation3 [shape = 's32[1]{0}', space=sflag, size = 0x4, scoped, tag = 'scoped memory for tpu_custom_call.1']
    #allocation4 [shape = 's32[1]{0}', space=sflag, size = 0x4, scoped, tag = 'scoped memory for tpu_custom_call.1']
    #allocation5 [shape = 'u8[32768]{0}', space=vmem, size = 0x8000, scoped, tag = 'input window, operand 1, single buffered']
    #allocation6 [shape = 's32[1]{0}', space=sflag, size = 0x4, scoped, tag = 'scoped memory for tpu_custom_call.1']
    #allocation7 [shape = 'u8[1024]{0}', space=vmem, size = 0x400, scoped, tag = 'input window, operand 2, single buffered']
    #allocation8 [shape = 'u8[16384]{0}', space=vmem, size = 0x4000, scoped, tag = 'output window, operand 0, single buffered']
    %8 = vsyncpa [#allocation3], 0
    %9 = vsyncpa [#allocation6], 0
    %10 = vsyncpa [#allocation4], 0
    // Predicated region
    $region2: #{tpu_custom_call.1} parent=1 // pred_check
      _
    $region3: #{tpu_custom_call.1} parent=1 // pred_check_branch
      %12 = sbr.rel (0) target = $region5
    $region4: #{tpu_custom_call.1} parent=1 // pred_region
      %14 = vsyncadd [#allocation3], 0
      %s15 = sshll.u32 %s0, 4
      %s16 = int_to_ptr.hbm [resolvable:$true] %s15
      %s17 = sshll.u32 [#allocation2], 4
      %s18 = int_to_ptr.vmem [resolvable:$true] %s17
      %23 = dma.hbm_to_vmem [thread:$0]  %s16, 256, %s18, [#allocation3], 128, 128, 8
    $region5: #{tpu_custom_call.1} parent=1 // pred_fallthru
      _
    // Predicated region
    $region6: #{tpu_custom_call.1} parent=1 // pred_check
      _
    $region7: #{tpu_custom_call.1} parent=1 // pred_check_branch
      %25 = sbr.rel (0) target = $region9
    $region8: #{tpu_custom_call.1} parent=1 // pred_region
      %27 = vsyncadd [#allocation6], 0
      %s28 = sshll.u32 %s1, 4
      %s29 = int_to_ptr.hbm [resolvable:$true] %s28
      %s30 = sshll.u32 [#allocation5], 4
      %s31 = int_to_ptr.vmem [resolvable:$true] %s30
      %36 = dma.hbm_to_vmem [thread:$0]  %s29, 1024, %s31, [#allocation6], 256, 256, 16
    $region9: #{tpu_custom_call.1} parent=1 // pred_fallthru
      _
    // Predicated region
    $region10: #{tpu_custom_call.1} parent=1 // pred_check
      _
    $region11: #{tpu_custom_call.1} parent=1 // pred_check_branch
      %38 = sbr.rel (0) target = $region13
    $region12: #{tpu_custom_call.1} parent=1 // pred_region
      %40 = vsyncadd [#allocation6], 0
      %s42 = sshll.u32 %s2, 4
      %s43 = int_to_ptr.hbm [resolvable:$true] %s42
      %s44 = sshll.u32 [#allocation7], 4
      %s45 = int_to_ptr.vmem [resolvable:$true] %s44
      %47 = dma.hbm_to_vmem [thread:$0]  %s43, 32, %s45, [#allocation6]
    $region13: #{tpu_custom_call.1} parent=1 // pred_fallthru
      _
    // Predicated region
    $region14: #{tpu_custom_call.1} parent=1 // pred_check
      _
    $region15: #{tpu_custom_call.1} parent=1 // pred_check_branch
      %49 = sbr.rel (0) target = $region17
    $region16: #{tpu_custom_call.1} parent=1 // pred_region
      %51 = dma.done [#allocation3], 256
    $region17: #{tpu_custom_call.1} parent=1 // pred_fallthru
      _
    // Predicated region
    $region18: #{tpu_custom_call.1} parent=1 // pred_check
      _
    $region19: #{tpu_custom_call.1} parent=1 // pred_check_branch
      %53 = sbr.rel (0) target = $region21
    $region20: #{tpu_custom_call.1} parent=1 // pred_region
      %55 = dma.done [#allocation6], 1024
    $region21: #{tpu_custom_call.1} parent=1 // pred_fallthru
      _
    // Predicated region
    $region22: #{tpu_custom_call.1} parent=1 // pred_check
      _
    $region23: #{tpu_custom_call.1} parent=1 // pred_check_branch
      %57 = sbr.rel (0) target = $region25
    $region24: #{tpu_custom_call.1} parent=1 // pred_region
      %59 = dma.done [#allocation6], 32
    $region25: #{tpu_custom_call.1} parent=1 // pred_fallthru
      _
    %v60 = vld [vmem:[#allocation2] sm:$0xff]
    %v61 = vld [vmem:[#allocation2 + $0x8] sm:$0xff]
    %v62 = vld [vmem:[#allocation5] sm:$0xff]
    %v63 = vld [vmem:[#allocation5 + $0x8] sm:$0xff]
    %v64 = vld [vmem:[#allocation5 + $0x10] sm:$0xff]
    %v65 = vld [vmem:[#allocation5 + $0x18] sm:$0xff]
    %v66 = vld [vmem:[#allocation5 + $0x20] sm:$0xff]
    %v67 = vld [vmem:[#allocation5 + $0x28] sm:$0xff]
    %v68 = vld [vmem:[#allocation5 + $0x30] sm:$0xff]
    %v69 = vld [vmem:[#allocation5 + $0x38] sm:$0xff]
    %v70 = vld [vmem:[#allocation7] sm:$0x3]
    %v72 = vperm.slane %v70, 0
    %v73 = vperm.slane %v70, 1
    %vm76 = vcmask 261120
    %v78 = vsel %vm76, %v60, 0
    %v81 = vsel %vm76, %v61, 0
    %83 = vmatpush.msra.mxu0 0.0
    %84 = vmatpush.msra.mxu0 0.0
    %85 = vmatpush.msra.mxu0 0.0
    %86 = vmatpush.msra.mxu0 0.0
    %87 = vmatpush.msra.mxu0 0.0
    %88 = vmatpush.msra.mxu0 0.0
    %89 = vmatpush.msra.mxu0 0.0
    %90 = vmatpush.msra.mxu0 0.0
    %91 = vmatpush.msra.mxu0 0.0
    %92 = vmatpush.msra.mxu0 0.0
    %93 = vmatpush.msra.mxu0 0.0
    %94 = vmatpush.msra.mxu0 0.0
    %95 = vmatpush.msra.mxu0 %v68
    %96 = vmatpush.msra.mxu0 %v66
    %97 = vmatpush.msra.mxu0 %v64
    %98 = vmatpush.msra.mxu0 %v62
    %99 = vmatmul.f32.gmra.mxu0 %v78
    %v100 = vpop.f32.mrf.mxu0
    %v101 = vadd.f32 %v72, %v100
    %102 = vmatmul.f32.gmra.mxu0 %v81
    %v103 = vpop.f32.mrf.mxu0
    %v104 = vadd.f32 %v72, %v103
    %105 = vdwg.mxu0
    %106 = vmatpush.msra.mxu0 0.0
    %107 = vmatpush.msra.mxu0 0.0
    %108 = vmatpush.msra.mxu0 0.0
    %109 = vmatpush.msra.mxu0 0.0
    %110 = vmatpush.msra.mxu0 0.0
    %111 = vmatpush.msra.mxu0 0.0
    %112 = vmatpush.msra.mxu0 0.0
    %113 = vmatpush.msra.mxu0 0.0
    %114 = vmatpush.msra.mxu0 0.0
    %115 = vmatpush.msra.mxu0 0.0
    %116 = vmatpush.msra.mxu0 0.0
    %117 = vmatpush.msra.mxu0 0.0
    %118 = vmatpush.msra.mxu0 %v69
    %119 = vmatpush.msra.mxu0 %v67
    %120 = vmatpush.msra.mxu0 %v65
    %121 = vmatpush.msra.mxu0 %v63
    %122 = vmatmul.f32.gmra.mxu0 %v78
    %v123 = vpop.f32.mrf.mxu0
    %v124 = vadd.f32 %v73, %v123
    %125 = vmatmul.f32.gmra.mxu0 %v81
    %v126 = vpop.f32.mrf.mxu0
    %v127 = vadd.f32 %v73, %v126
    %128 = vdwg.mxu0
    %129 = vst [vmem:[#allocation8] sm:$0xff] %v101
    %130 = vst [vmem:[#allocation8 + $0x8] sm:$0xff] %v124
    %131 = vst [vmem:[#allocation8 + $0x10] sm:$0xff] %v104
    %132 = vst [vmem:[#allocation8 + $0x18] sm:$0xff] %v127
    // Predicated region
    $region26: #{tpu_custom_call.1} parent=1 // pred_check
      _
    $region27: #{tpu_custom_call.1} parent=1 // pred_check_branch
      %134 = sbr.rel (0) target = $region29
    $region28: #{tpu_custom_call.1} parent=1 // pred_region
      %136 = vsyncadd [#allocation4], 0
      %s137 = sshll.u32 [#allocation8], 4
      %s138 = int_to_ptr.vmem [resolvable:$true] %s137
      %s139 = sshll.u32 %s3, 4
      %s140 = int_to_ptr.hbm [resolvable:$true] %s139
      %145 = dma.vmem_to_hbm [thread:$0]  %s138, 512, %s140, [#allocation4], 256, 256, 16
    $region29: #{tpu_custom_call.1} parent=1 // pred_fallthru
      _
    // Predicated region
    $region30: #{tpu_custom_call.1} parent=1 // pred_check
      _
    $region31: #{tpu_custom_call.1} parent=1 // pred_check_branch
      %147 = sbr.rel (0) target = $region33
    $region32: #{tpu_custom_call.1} parent=1 // pred_region
      %149 = dma.done [#allocation4], 512
    $region33: #{tpu_custom_call.1} parent=1 // pred_fallthru
      _
    %150 = vsyncpa [#allocation3], 1
    %151 = vsyncpa [#allocation6], 1
    %152 = vsyncpa [#allocation4], 1

</llo_original>
